<compile_context>
chip_gen: v5e
topology: v5e:2x2
jax: 0.10.0
libtpu: 0.0.40
codegen_flags: <defaults>
</compile_context>

<pallas_src>
import jax
import jax.numpy as jnp
import numpy as np
from jax.experimental import pallas as pl
from jax.experimental.pallas import tpu as pltpu


def _round_up(x, m):
    return ((x + m - 1) // m) * m


def _instance_mask_kernel(x_ref, emb_ref, w1_ref, b1_ref, w2_ref, b2_ref, o_ref):
    # Single fused pass per batch tile: no K grid axis / scratch accumulator
    # (kernel is HBM-bound; extra grid axes would only add per-step overhead).
    h = jnp.dot(emb_ref[...], w1_ref[...], preferred_element_type=jnp.float32)
    h = jnp.maximum(h + b1_ref[...], 0.0)
    wgt = jnp.dot(h, w2_ref[...], preferred_element_type=jnp.float32)
    wgt = wgt + b2_ref[...]
    o_ref[...] = (x_ref[...] * wgt).astype(o_ref.dtype)


def instance_mask(x, emb, w1, b1, w2, b2):
    """x, emb: (b, f, e) fp32. w1: (d, wide), b1: (wide,)|(1,wide),
    w2: (wide, d), b2: (d,)|(1,d). Returns (b, f, e)."""
    b, f, e = x.shape
    d = f * e
    wide = w1.shape[1]

    # Lane-align feature dims (128); sublane-align the batch.
    dp = _round_up(d, 128)
    widep = _round_up(wide, 128)
    bp = _round_up(b, 8)

    # Tile height over the batch:
    #   * small batches: one full-height tile,
    #   * batches >= 512: split into 2 tiles (v7x megacore), up to 1024 rows,
    #   * large batches: 1024-row tiles; ragged last tile handled by Pallas.
    if bp < 512:
        tm = bp
    elif bp <= 2048:
        tm = _round_up(pl.cdiv(bp, 2), 8)
    else:
        tm = 1024
    n_tiles = pl.cdiv(bp, tm)

    # Flatten; pad only when actually ragged (common case d == k*128, b == k*8
    # needs no copies at all).
    x_flat = x.reshape(b, d)
    emb_flat = emb.reshape(b, d)
    padded = (bp != b) or (dp != d)
    if padded:
        pad = ((0, bp - b), (0, dp - d))
        x_flat = jnp.pad(x_flat, pad)
        emb_flat = jnp.pad(emb_flat, pad)

    w1p = w1
    w2p = w2
    b1p = b1.reshape(1, wide)
    b2p = b2.reshape(1, d)
    if (dp != d) or (widep != wide):
        w1p = jnp.pad(w1p, ((0, dp - d), (0, widep - wide)))
        w2p = jnp.pad(w2p, ((0, widep - wide), (0, dp - d)))
        b1p = jnp.pad(b1p, ((0, 0), (0, widep - wide)))
        b2p = jnp.pad(b2p, ((0, 0), (0, dp - d)))

    # VMEM budget from actual tile/weight bytes: x/emb/out tiles double-buffered
    # by the pipeline, weights/biases assumed double-buffered too, plus the h
    # intermediate; 2x headroom, floor 16 MiB, cap 48 MiB (v7x has 64 MiB).
    itemsize = 4
    tile_bytes = 3 * 2 * tm * dp * itemsize
    weight_bytes = 2 * (dp * widep + widep * dp + widep + dp) * itemsize
    act_bytes = 2 * tm * widep * itemsize
    vmem_limit = int(min(max(2 * (tile_bytes + weight_bytes + act_bytes),
                             16 * 1024 * 1024),
                         48 * 1024 * 1024))

    out_flat = pl.pallas_call(
        _instance_mask_kernel,
        out_shape=jax.ShapeDtypeStruct((bp, dp), x.dtype),
        grid=(n_tiles,),
        in_specs=[
            pl.BlockSpec((tm, dp), lambda i: (i, 0)),      # x tile (pipelined)
            pl.BlockSpec((tm, dp), lambda i: (i, 0)),      # emb tile (pipelined)
            pl.BlockSpec((dp, widep), lambda i: (0, 0)),   # W1 (VMEM-resident)
            pl.BlockSpec((1, widep), lambda i: (0, 0)),    # b1 (VMEM-resident)
            pl.BlockSpec((widep, dp), lambda i: (0, 0)),   # W2 (VMEM-resident)
            pl.BlockSpec((1, dp), lambda i: (0, 0)),       # b2 (VMEM-resident)
        ],
        out_specs=pl.BlockSpec((tm, dp), lambda i: (i, 0)),
        compiler_params=pltpu.CompilerParams(
            dimension_semantics=("parallel",),
            vmem_limit_bytes=vmem_limit,
        ),
    )(x_flat, emb_flat, w1p, b1p, w2p, b2p)

    if padded:
        out_flat = out_flat[:b, :d]
    return out_flat.reshape(b, f, e)


def _reference_f64(x, emb, w1, b1, w2, b2):
    xn = np.asarray(x, np.float64)
    en = np.asarray(emb, np.float64)
    w1n = np.asarray(w1, np.float64)
    b1n = np.asarray(b1, np.float64).reshape(1, -1)
    w2n = np.asarray(w2, np.float64)
    b2n = np.asarray(b2, np.float64).reshape(1, -1)
    b, f, e = xn.shape
    h = np.maximum(en.reshape(b, -1) @ w1n + b1n, 0.0)
    wgt = h @ w2n + b2n
    return (xn.reshape(b, -1) * wgt).reshape(b, f, e)


def _reference_bf16_operands(x, emb, w1, b1, w2, b2):
    # Calibration reference: explicit bf16 operands with fp32 accumulation
    # (strictly worse-or-equal numerics than the kernel's fp32 operands).
    b, f, e = x.shape
    x_ = emb.reshape(b, -1)
    h = jnp.dot(x_.astype(jnp.bfloat16), w1.astype(jnp.bfloat16),
                preferred_element_type=jnp.float32) + b1.reshape(1, -1)
    h = jnp.maximum(h, 0.0)
    wgt = jnp.dot(h.astype(jnp.bfloat16), w2.astype(jnp.bfloat16),
                  preferred_element_type=jnp.float32) + b2.reshape(1, -1)
    return (x.reshape(b, -1) * wgt).reshape(b, f, e)


if __name__ == "__main__":
    # Small shapes consistent with the module: b=8 batches, f=8 fields, e=16 emb dim.
    b, f, e = 8, 8, 16
    input_dim = f * e                 # 128  (lane-aligned -> zero-copy wrapper path)
    increase = 3
    wide = input_dim * increase       # 384

    key = jax.random.PRNGKey(0)
    kx, kemb, kw1, kb1, kw2, kb2 = jax.random.split(key, 6)

    x = jax.random.normal(kx, (b, f, e), dtype=jnp.float32)
    emb = jax.random.normal(kemb, (b, f, e), dtype=jnp.float32)

    # TODO(synk): module's custom weight_init(...) not ported; deterministic synthetic init instead.
    w1 = jax.random.normal(kw1, (input_dim, wide), dtype=jnp.float32) * (1.0 / jnp.sqrt(input_dim))
    b1 = jax.random.normal(kb1, (1, wide), dtype=jnp.float32) * 0.01
    w2 = jax.random.normal(kw2, (wide, input_dim), dtype=jnp.float32) * (1.0 / jnp.sqrt(wide))
    b2 = jax.random.normal(kb2, (1, input_dim), dtype=jnp.float32) * 0.01

    out = instance_mask(x, emb, w1, b1, w2, b2)
    out = jax.block_until_ready(out)
    assert out.shape == (b, f, e)

    # Self-calibrating correctness check: the kernel keeps fp32 MXU operands;
    # allow at most 4x the error of an explicit bf16-operand matmul (this
    # covers the TPU MXU's default reduced-precision f32 path while still
    # rejecting any real semantic bug).
    ref = _reference_f64(x, emb, w1, b1, w2, b2)
    ref_bf16 = np.asarray(_reference_bf16_operands(x, emb, w1, b1, w2, b2), np.float64)
    out_np = np.asarray(out, np.float64)
    err_kernel = float(np.max(np.abs(out_np - ref)))
    err_bf16 = float(np.max(np.abs(ref_bf16 - ref)))
    assert err_kernel <= 4.0 * err_bf16 + 1e-3, (err_kernel, err_bf16)

    print("KERNEL_OK")
</pallas_src>

<mosaic_0001>
module attributes {stable_mosaic.version = 11 : i64} {
  func.func @_instance_mask_kernel(%arg0: i32, %arg1: memref<8x128xf32, #tpu.memory_space<vmem>>, %arg2: memref<8x128xf32, #tpu.memory_space<vmem>>, %arg3: memref<128x384xf32, #tpu.memory_space<vmem>>, %arg4: memref<1x384xf32, #tpu.memory_space<vmem>>, %arg5: memref<384x128xf32, #tpu.memory_space<vmem>>, %arg6: memref<1x128xf32, #tpu.memory_space<vmem>>, %arg7: memref<8x128xf32, #tpu.memory_space<vmem>>) attributes {dimension_semantics = [#tpu.dimension_semantics<parallel>], iteration_bounds = array<i64: 1>, scalar_prefetch = 0 : i64, scratch_operands = 0 : i64, tpu.core_type = #tpu.core_type<tc>, window_params = [{transform_indices = @transform_0, window_bounds = array<i64: 8, 128>}, {transform_indices = @transform_1, window_bounds = array<i64: 8, 128>}, {pipeline_mode = #tpu.pipeline_mode<synchronous>, transform_indices = @transform_2, window_bounds = array<i64: 128, 384>}, {pipeline_mode = #tpu.pipeline_mode<synchronous>, transform_indices = @transform_3, window_bounds = array<i64: 1, 384>}, {pipeline_mode = #tpu.pipeline_mode<synchronous>, transform_indices = @transform_4, window_bounds = array<i64: 384, 128>}, {pipeline_mode = #tpu.pipeline_mode<synchronous>, transform_indices = @transform_5, window_bounds = array<i64: 1, 128>}, {transform_indices = @transform_6, window_bounds = array<i64: 8, 128>}]} {
    %c0 = arith.constant 0 : index
    %c0_0 = arith.constant 0 : index
    %0 = vector.load %arg2[%c0, %c0_0] : memref<8x128xf32, #tpu.memory_space<vmem>>, vector<8x128xf32>
    %c0_1 = arith.constant 0 : index
    %c0_2 = arith.constant 0 : index
    %1 = vector.load %arg3[%c0_1, %c0_2] : memref<128x384xf32, #tpu.memory_space<vmem>>, vector<128x384xf32>
    %cst = arith.constant dense<0.000000e+00> : vector<8x384xf32>
    %2 = tpu.matmul %0, %1, %cst {dimension_numbers = #tpu.dot_dimension_numbers<[1], [0], [0], [1], [0, 0, 1, 1], [], []>} : vector<8x128xf32>, vector<128x384xf32>, vector<8x384xf32> -> vector<8x384xf32>
    %c0_3 = arith.constant 0 : index
    %c0_4 = arith.constant 0 : index
    %3 = vector.load %arg4[%c0_3, %c0_4] : memref<1x384xf32, #tpu.memory_space<vmem>>, vector<1x384xf32>
    %4 = vector.broadcast %3 : vector<1x384xf32> to vector<8x384xf32>
    %5 = arith.addf %2, %4 : vector<8x384xf32>
    %cst_5 = arith.constant 0.000000e+00 : f32
    %6 = vector.broadcast %cst_5 : f32 to vector<8x384xf32>
    %7 = arith.maximumf %5, %6 : vector<8x384xf32>
    %c0_6 = arith.constant 0 : index
    %c0_7 = arith.constant 0 : index
    %8 = vector.load %arg5[%c0_6, %c0_7] : memref<384x128xf32, #tpu.memory_space<vmem>>, vector<384x128xf32>
    %cst_8 = arith.constant dense<0.000000e+00> : vector<8x128xf32>
    %9 = tpu.matmul %7, %8, %cst_8 {dimension_numbers = #tpu.dot_dimension_numbers<[1], [0], [0], [1], [0, 0, 1, 1], [], []>} : vector<8x384xf32>, vector<384x128xf32>, vector<8x128xf32> -> vector<8x128xf32>
    %c0_9 = arith.constant 0 : index
    %c0_10 = arith.constant 0 : index
    %10 = vector.load %arg6[%c0_9, %c0_10] : memref<1x128xf32, #tpu.memory_space<vmem>>, vector<1x128xf32>
    %11 = vector.broadcast %10 : vector<1x128xf32> to vector<8x128xf32>
    %12 = arith.addf %9, %11 : vector<8x128xf32>
    %c0_11 = arith.constant 0 : index
    %c0_12 = arith.constant 0 : index
    %13 = vector.load %arg1[%c0_11, %c0_12] : memref<8x128xf32, #tpu.memory_space<vmem>>, vector<8x128xf32>
    %14 = arith.mulf %13, %12 : vector<8x128xf32>
    %c0_13 = arith.constant 0 : index
    %c0_14 = arith.constant 0 : index
    %15 = vector.load %arg7[%c0_13, %c0_14] : memref<8x128xf32, #tpu.memory_space<vmem>>, vector<8x128xf32>
    tpu.vector_store %arg7[%c0_13, %c0_14], %14 {strides = array<i32>} : memref<8x128xf32, #tpu.memory_space<vmem>>, vector<8x128xf32>,
    return
  }
  func.func @transform_0(%arg0: i32) -> (i32, i32) {
    %c0_i32 = arith.constant 0 : i32
    %c0_i32_0 = arith.constant 0 : i32
    return %arg0, %c0_i32 : i32, i32
  }
  func.func @transform_1(%arg0: i32) -> (i32, i32) {
    %c0_i32 = arith.constant 0 : i32
    %c0_i32_0 = arith.constant 0 : i32
    return %arg0, %c0_i32 : i32, i32
  }
  func.func @transform_2(%arg0: i32) -> (i32, i32) {
    %c0_i32 = arith.constant 0 : i32
    %c0_i32_0 = arith.constant 0 : i32
    %c0_i32_1 = arith.constant 0 : i32
    return %c0_i32, %c0_i32_0 : i32, i32
  }
  func.func @transform_3(%arg0: i32) -> (i32, i32) {
    %c0_i32 = arith.constant 0 : i32
    %c0_i32_0 = arith.constant 0 : i32
    %c0_i32_1 = arith.constant 0 : i32
    return %c0_i32, %c0_i32_0 : i32, i32
  }
  func.func @transform_4(%arg0: i32) -> (i32, i32) {
    %c0_i32 = arith.constant 0 : i32
    %c0_i32_0 = arith.constant 0 : i32
    %c0_i32_1 = arith.constant 0 : i32
    return %c0_i32, %c0_i32_0 : i32, i32
  }
  func.func @transform_5(%arg0: i32) -> (i32, i32) {
    %c0_i32 = arith.constant 0 : i32
    %c0_i32_0 = arith.constant 0 : i32
    %c0_i32_1 = arith.constant 0 : i32
    return %c0_i32, %c0_i32_0 : i32, i32
  }
  func.func @transform_6(%arg0: i32) -> (i32, i32) {
    %c0_i32 = arith.constant 0 : i32
    %c0_i32_0 = arith.constant 0 : i32
    return %arg0, %c0_i32 : i32, i32
  }
}

</mosaic_0001>

<llo_original>
// kernel: tpu_custom_call.1
$region0: #{tpu_custom_call.1}
  #allocation0 [shape = 'u32[]', space=smem, size = 0x4, offset = 0x4, fixed_abs, tag = 'smem constant byte address 0x4 - core index']
  #allocation1 [shape = 'u32[72,128]{1,0:T(1,128)}', space=vmem, size = 0x9000, scoped, tag = 'internal scratch']
  %s0 = inlined_call_operand.hbm [shape: f32[8,128], index: 0, kind: input, shape index: {}]
  %s1 = inlined_call_operand.hbm [shape: f32[8,128], index: 1, kind: input, shape index: {}]
  %s2 = inlined_call_operand.hbm [shape: f32[128,384], index: 2, kind: input, shape index: {}]
  %s3 = inlined_call_operand.hbm [shape: f32[1,384], index: 3, kind: input, shape index: {}]
  %s4 = inlined_call_operand.hbm [shape: f32[384,128], index: 4, kind: input, shape index: {}]
  %s5 = inlined_call_operand.vmem [shape: f32[1,128], index: 5, kind: input, shape index: {}]
  %s6 = inlined_call_operand.hbm [shape: f32[8,128], index: 6, kind: output, shape index: {}]
  %s7 = sld [smem:[#allocation0]]
  $region54: #{tpu_custom_call.1} parent=0
    _
  %s9 = ssub.s32 1, %s7
  %s10 = scalar_select 0, %s9, %s7
  $region1: #{tpu_custom_call.1} parent=0
    #allocation2 [shape = 'u8[4096]{0}', space=vmem, size = 0x1000, scoped, tag = 'input window, operand 0, single buffered']
    #allocation3 [shape = 's32[1]{0}', space=sflag, size = 0x4, scoped, tag = 'scoped memory for tpu_custom_call.1']
    #allocation4 [shape = 's32[1]{0}', space=sflag, size = 0x4, scoped, tag = 'scoped memory for tpu_custom_call.1']
    #allocation5 [shape = 'u8[4096]{0}', space=vmem, size = 0x1000, scoped, tag = 'input window, operand 1, single buffered']
    #allocation6 [shape = 's32[1]{0}', space=sflag, size = 0x4, scoped, tag = 'scoped memory for tpu_custom_call.1']
    #allocation7 [shape = 'u8[196608]{0}', space=vmem, size = 0x30000, scoped, tag = 'input window, operand 2, single buffered']
    #allocation8 [shape = 'u8[1536]{0}', space=vmem, size = 0x800, scoped, tag = 'input window, operand 3, single buffered']
    #allocation9 [shape = 's32[1]{0}', space=sflag, size = 0x4, scoped, tag = 'scoped memory for tpu_custom_call.1']
    #allocation10 [shape = 'u8[196608]{0}', space=vmem, size = 0x30000, scoped, tag = 'input window, operand 4, single buffered']
    #allocation11 [shape = 'u8[4096]{0}', space=vmem, size = 0x1000, scoped, tag = 'output window, operand 0, single buffered']
    %11 = vsyncpa [#allocation3], 0
    %12 = vsyncpa [#allocation6], 0
    %13 = vsyncpa [#allocation9], 0
    %14 = vsyncpa [#allocation4], 0
    // Predicated region
    $region2: #{tpu_custom_call.1} parent=1 // pred_check
      _
    $region3: #{tpu_custom_call.1} parent=1 // pred_check_branch
      %16 = sbr.rel (0) target = $region5
    $region4: #{tpu_custom_call.1} parent=1 // pred_region
      %18 = vsyncadd [#allocation3], 0
      %s20 = sshll.u32 %s0, 4
      %s21 = int_to_ptr.hbm [resolvable:$true] %s20
      %s22 = sshll.u32 [#allocation2], 4
      %s23 = int_to_ptr.vmem [resolvable:$true] %s22
      %25 = dma.hbm_to_vmem [thread:$0]  %s21, 128, %s23, [#allocation3]
    $region5: #{tpu_custom_call.1} parent=1 // pred_fallthru
      _
    // Predicated region
    $region6: #{tpu_custom_call.1} parent=1 // pred_check
      _
    $region7: #{tpu_custom_call.1} parent=1 // pred_check_branch
      %27 = sbr.rel (0) target = $region9
    $region8: #{tpu_custom_call.1} parent=1 // pred_region
      %29 = vsyncadd [#allocation6], 0
      %s31 = sshll.u32 %s1, 4
      %s32 = int_to_ptr.hbm [resolvable:$true] %s31
      %s33 = sshll.u32 [#allocation5], 4
      %s34 = int_to_ptr.vmem [resolvable:$true] %s33
      %36 = dma.hbm_to_vmem [thread:$0]  %s32, 128, %s34, [#allocation6]
    $region9: #{tpu_custom_call.1} parent=1 // pred_fallthru
      _
    // Predicated region
    $region10: #{tpu_custom_call.1} parent=1 // pred_check
      _
    $region11: #{tpu_custom_call.1} parent=1 // pred_check_branch
      %38 = sbr.rel (0) target = $region13
    $region12: #{tpu_custom_call.1} parent=1 // pred_region
      %40 = vsyncadd [#allocation6], 0
      %s41 = sshll.u32 %s2, 4
      %s42 = int_to_ptr.hbm [resolvable:$true] %s41
      %s43 = sshll.u32 [#allocation7], 4
      %s44 = int_to_ptr.vmem [resolvable:$true] %s43
      %49 = dma.hbm_to_vmem [thread:$0]  %s42, 6144, %s44, [#allocation6], 384, 384, 24
    $region13: #{tpu_custom_call.1} parent=1 // pred_fallthru
      _
    // Predicated region
    $region14: #{tpu_custom_call.1} parent=1 // pred_check
      _
    $region15: #{tpu_custom_call.1} parent=1 // pred_check_branch
      %51 = sbr.rel (0) target = $region17
    $region16: #{tpu_custom_call.1} parent=1 // pred_region
      %53 = vsyncadd [#allocation9], 0
      %s55 = sshll.u32 %s3, 4
      %s56 = int_to_ptr.hbm [resolvable:$true] %s55
      %s57 = sshll.u32 [#allocation8], 4
      %s58 = int_to_ptr.vmem [resolvable:$true] %s57
      %60 = dma.hbm_to_vmem [thread:$0]  %s56, 48, %s58, [#allocation9]
    $region17: #{tpu_custom_call.1} parent=1 // pred_fallthru
      _
    // Predicated region
    $region18: #{tpu_custom_call.1} parent=1 // pred_check
      _
    $region19: #{tpu_custom_call.1} parent=1 // pred_check_branch
      %62 = sbr.rel (0) target = $region21
    $region20: #{tpu_custom_call.1} parent=1 // pred_region
      %64 = vsyncadd [#allocation9], 0
      %s65 = sshll.u32 %s4, 4
      %s66 = int_to_ptr.hbm [resolvable:$true] %s65
      %s67 = sshll.u32 [#allocation10], 4
      %s68 = int_to_ptr.vmem [resolvable:$true] %s67
      %73 = dma.hbm_to_vmem [thread:$0]  %s66, 6144, %s68, [#allocation9], 128, 128, 8
    $region21: #{tpu_custom_call.1} parent=1 // pred_fallthru
      _
    // Predicated region
    $region22: #{tpu_custom_call.1} parent=1 // pred_check
      _
    $region23: #{tpu_custom_call.1} parent=1 // pred_check_branch
      %75 = sbr.rel (0) target = $region25
    $region24: #{tpu_custom_call.1} parent=1 // pred_region
      _
    $region25: #{tpu_custom_call.1} parent=1 // pred_fallthru
      _
    // Predicated region
    $region26: #{tpu_custom_call.1} parent=1 // pred_check
      _
    $region27: #{tpu_custom_call.1} parent=1 // pred_check_branch
      %77 = sbr.rel (0) target = $region29
    $region28: #{tpu_custom_call.1} parent=1 // pred_region
      %79 = dma.done [#allocation3], 128
    $region29: #{tpu_custom_call.1} parent=1 // pred_fallthru
      _
    // Predicated region
    $region30: #{tpu_custom_call.1} parent=1 // pred_check
      _
    $region31: #{tpu_custom_call.1} parent=1 // pred_check_branch
      %81 = sbr.rel (0) target = $region33
    $region32: #{tpu_custom_call.1} parent=1 // pred_region
      %83 = dma.done [#allocation6], 128
    $region33: #{tpu_custom_call.1} parent=1 // pred_fallthru
      _
    // Predicated region
    $region34: #{tpu_custom_call.1} parent=1 // pred_check
      _
    $region35: #{tpu_custom_call.1} parent=1 // pred_check_branch
      %85 = sbr.rel (0) target = $region37
    $region36: #{tpu_custom_call.1} parent=1 // pred_region
      %87 = dma.done [#allocation6], 6144
    $region37: #{tpu_custom_call.1} parent=1 // pred_fallthru
      _
    // Predicated region
    $region38: #{tpu_custom_call.1} parent=1 // pred_check
      _
    $region39: #{tpu_custom_call.1} parent=1 // pred_check_branch
      %89 = sbr.rel (0) target = $region41
    $region40: #{tpu_custom_call.1} parent=1 // pred_region
      %91 = dma.done [#allocation9], 48
    $region41: #{tpu_custom_call.1} parent=1 // pred_fallthru
      _
    // Predicated region
    $region42: #{tpu_custom_call.1} parent=1 // pred_check
      _
    $region43: #{tpu_custom_call.1} parent=1 // pred_check_branch
      %93 = sbr.rel (0) target = $region45
    $region44: #{tpu_custom_call.1} parent=1 // pred_region
      %95 = dma.done [#allocation9], 6144
    $region45: #{tpu_custom_call.1} parent=1 // pred_fallthru
      _
    %v96 = vld [vmem:[#allocation5] sm:$0xff]
    %v97 = vld [vmem:[#allocation7] sm:$0xff]
    %v98 = vld [vmem:[#allocation7 + $0x8] sm:$0xff]
    %v99 = vld [vmem:[#allocation7 + $0x10] sm:$0xff]
    %v100 = vld [vmem:[#allocation7 + $0x18] sm:$0xff]
    %v101 = vld [vmem:[#allocation7 + $0x20] sm:$0xff]
    %v102 = vld [vmem:[#allocation7 + $0x28] sm:$0xff]
    %v103 = vld [vmem:[#allocation7 + $0x30] sm:$0xff]
    %v104 = vld [vmem:[#allocation7 + $0x38] sm:$0xff]
    %v105 = vld [vmem:[#allocation7 + $0x40] sm:$0xff]
    %v106 = vld [vmem:[#allocation7 + $0x48] sm:$0xff]
    %v107 = vld [vmem:[#allocation7 + $0x50] sm:$0xff]
    %v108 = vld [vmem:[#allocation7 + $0x58] sm:$0xff]
    %v109 = vld [vmem:[#allocation7 + $0x60] sm:$0xff]
    %v110 = vld [vmem:[#allocation7 + $0x68] sm:$0xff]
    %v111 = vld [vmem:[#allocation7 + $0x70] sm:$0xff]
    %v112 = vld [vmem:[#allocation7 + $0x78] sm:$0xff]
    %v113 = vld [vmem:[#allocation7 + $0x80] sm:$0xff]
    %v114 = vld [vmem:[#allocation7 + $0x88] sm:$0xff]
    %v115 = vld [vmem:[#allocation7 + $0x90] sm:$0xff]
    %v116 = vld [vmem:[#allocation7 + $0x98] sm:$0xff]
    %v117 = vld [vmem:[#allocation7 + $0xa0] sm:$0xff]
    %v118 = vld [vmem:[#allocation7 + $0xa8] sm:$0xff]
    %v119 = vld [vmem:[#allocation7 + $0xb0] sm:$0xff]
    %v120 = vld [vmem:[#allocation7 + $0xb8] sm:$0xff]
    %v121 = vld [vmem:[#allocation7 + $0xc0] sm:$0xff]
    %v122 = vld [vmem:[#allocation7 + $0xc8] sm:$0xff]
    %v123 = vld [vmem:[#allocation7 + $0xd0] sm:$0xff]
    %v124 = vld [vmem:[#allocation7 + $0xd8] sm:$0xff]
    %v125 = vld [vmem:[#allocation7 + $0xe0] sm:$0xff]
    %v126 = vld [vmem:[#allocation7 + $0xe8] sm:$0xff]
    %v127 = vld [vmem:[#allocation7 + $0xf0] sm:$0xff]
    %v128 = vld [vmem:[#allocation7 + $0xf8] sm:$0xff]
    %v129 = vld [vmem:[#allocation7 + $0x100] sm:$0xff]
    %v130 = vld [vmem:[#allocation7 + $0x108] sm:$0xff]
    %v131 = vld [vmem:[#allocation7 + $0x110] sm:$0xff]
    %v132 = vld [vmem:[#allocation7 + $0x118] sm:$0xff]
    %v133 = vld [vmem:[#allocation7 + $0x120] sm:$0xff]
    %v134 = vld [vmem:[#allocation7 + $0x128] sm:$0xff]
    %v135 = vld [vmem:[#allocation7 + $0x130] sm:$0xff]
    %v136 = vld [vmem:[#allocation7 + $0x138] sm:$0xff]
    %v137 = vld [vmem:[#allocation7 + $0x140] sm:$0xff]
    %v138 = vld [vmem:[#allocation7 + $0x148] sm:$0xff]
    %v139 = vld [vmem:[#allocation7 + $0x150] sm:$0xff]
    %v140 = vld [vmem:[#allocation7 + $0x158] sm:$0xff]
    %v141 = vld [vmem:[#allocation7 + $0x160] sm:$0xff]
    %v142 = vld [vmem:[#allocation7 + $0x168] sm:$0xff]
    %v143 = vld [vmem:[#allocation7 + $0x170] sm:$0xff]
    %v144 = vld [vmem:[#allocation7 + $0x178] sm:$0xff]
    %v145 = vld [vmem:[#allocation8] sm:$0x7]
    %v147 = vperm.slane %v145, 0
    %v148 = vperm.slane %v145, 1
    %v149 = vperm.slane %v145, 2
    %153 = vmatpush.msra.mxu0 %v142
    %154 = vmatpush.msra.mxu0 %v139
    %155 = vmatpush.msra.mxu0 %v136
    %156 = vmatpush.msra.mxu0 %v133
    %157 = vmatpush.msra.mxu0 %v130
    %158 = vmatpush.msra.mxu0 %v127
    %159 = vmatpush.msra.mxu0 %v124
    %160 = vmatpush.msra.mxu0 %v121
    %161 = vmatpush.msra.mxu0 %v118
    %162 = vmatpush.msra.mxu0 %v115
    %163 = vmatpush.msra.mxu0 %v112
    %164 = vmatpush.msra.mxu0 %v109
    %165 = vmatpush.msra.mxu0 %v106
    %166 = vmatpush.msra.mxu0 %v103
    %167 = vmatpush.msra.mxu0 %v100
    %168 = vmatpush.msra.mxu0 %v97
    %169 = vmatmul.f32.gmra.mxu0 %v96
    %v170 = vpop.f32.mrf.mxu0
    %v171 = vadd.f32 %v147, %v170
    %172 = vdwg.mxu0
    %173 = vmatpush.msra.mxu0 %v143
    %174 = vmatpush.msra.mxu0 %v140
    %175 = vmatpush.msra.mxu0 %v137
    %176 = vmatpush.msra.mxu0 %v134
    %177 = vmatpush.msra.mxu0 %v131
    %178 = vmatpush.msra.mxu0 %v128
    %179 = vmatpush.msra.mxu0 %v125
    %180 = vmatpush.msra.mxu0 %v122
    %181 = vmatpush.msra.mxu0 %v119
    %182 = vmatpush.msra.mxu0 %v116
    %183 = vmatpush.msra.mxu0 %v113
    %184 = vmatpush.msra.mxu0 %v110
    %185 = vmatpush.msra.mxu0 %v107
    %186 = vmatpush.msra.mxu0 %v104
    %187 = vmatpush.msra.mxu0 %v101
    %188 = vmatpush.msra.mxu0 %v98
    %189 = vmatmul.f32.gmra.mxu0 %v96
    %v190 = vpop.f32.mrf.mxu0
    %v191 = vadd.f32 %v148, %v190
    %192 = vdwg.mxu0
    %193 = vmatpush.msra.mxu0 %v144
    %194 = vmatpush.msra.mxu0 %v141
    %195 = vmatpush.msra.mxu0 %v138
    %196 = vmatpush.msra.mxu0 %v135
    %197 = vmatpush.msra.mxu0 %v132
    %198 = vmatpush.msra.mxu0 %v129
    %199 = vmatpush.msra.mxu0 %v126
    %200 = vmatpush.msra.mxu0 %v123
    %201 = vmatpush.msra.mxu0 %v120
    %202 = vmatpush.msra.mxu0 %v117
    %203 = vmatpush.msra.mxu0 %v114
    %204 = vmatpush.msra.mxu0 %v111
    %205 = vmatpush.msra.mxu0 %v108
    %206 = vmatpush.msra.mxu0 %v105
    %207 = vmatpush.msra.mxu0 %v102
    %208 = vmatpush.msra.mxu0 %v99
    %209 = vmatmul.f32.gmra.mxu0 %v96
    %v210 = vpop.f32.mrf.mxu0
    %v211 = vadd.f32 %v149, %v210
    %212 = vdwg.mxu0
    %v213 = vmax.f32 %v171, 0.0
    %v214 = vmax.f32 %v191, 0.0
    %v215 = vmax.f32 %v211, 0.0
    %v216 = vld [vmem:[#allocation10] sm:$0xff]
    %v217 = vld [vmem:[#allocation10 + $0x8] sm:$0xff]
    %v218 = vld [vmem:[#allocation10 + $0x10] sm:$0xff]
    %v219 = vld [vmem:[#allocation10 + $0x18] sm:$0xff]
    %v220 = vld [vmem:[#allocation10 + $0x20] sm:$0xff]
    %v221 = vld [vmem:[#allocation10 + $0x28] sm:$0xff]
    %v222 = vld [vmem:[#allocation10 + $0x30] sm:$0xff]
    %v223 = vld [vmem:[#allocation10 + $0x38] sm:$0xff]
    %v224 = vld [vmem:[#allocation10 + $0x40] sm:$0xff]
    %v225 = vld [vmem:[#allocation10 + $0x48] sm:$0xff]
    %v226 = vld [vmem:[#allocation10 + $0x50] sm:$0xff]
    %v227 = vld [vmem:[#allocation10 + $0x58] sm:$0xff]
    %v228 = vld [vmem:[#allocation10 + $0x60] sm:$0xff]
    %v229 = vld [vmem:[#allocation10 + $0x68] sm:$0xff]
    %v230 = vld [vmem:[#allocation10 + $0x70] sm:$0xff]
    %v231 = vld [vmem:[#allocation10 + $0x78] sm:$0xff]
    %v232 = vld [vmem:[#allocation10 + $0x80] sm:$0xff]
    %v233 = vld [vmem:[#allocation10 + $0x88] sm:$0xff]
    %v234 = vld [vmem:[#allocation10 + $0x90] sm:$0xff]
    %v235 = vld [vmem:[#allocation10 + $0x98] sm:$0xff]
    %v236 = vld [vmem:[#allocation10 + $0xa0] sm:$0xff]
    %v237 = vld [vmem:[#allocation10 + $0xa8] sm:$0xff]
    %v238 = vld [vmem:[#allocation10 + $0xb0] sm:$0xff]
    %v239 = vld [vmem:[#allocation10 + $0xb8] sm:$0xff]
    %v240 = vld [vmem:[#allocation10 + $0xc0] sm:$0xff]
    %v241 = vld [vmem:[#allocation10 + $0xc8] sm:$0xff]
    %v242 = vld [vmem:[#allocation10 + $0xd0] sm:$0xff]
    %v243 = vld [vmem:[#allocation10 + $0xd8] sm:$0xff]
    %v244 = vld [vmem:[#allocation10 + $0xe0] sm:$0xff]
    %v245 = vld [vmem:[#allocation10 + $0xe8] sm:$0xff]
    %v246 = vld [vmem:[#allocation10 + $0xf0] sm:$0xff]
    %v247 = vld [vmem:[#allocation10 + $0xf8] sm:$0xff]
    %v248 = vld [vmem:[#allocation10 + $0x100] sm:$0xff]
    %v249 = vld [vmem:[#allocation10 + $0x108] sm:$0xff]
    %v250 = vld [vmem:[#allocation10 + $0x110] sm:$0xff]
    %v251 = vld [vmem:[#allocation10 + $0x118] sm:$0xff]
    %v252 = vld [vmem:[#allocation10 + $0x120] sm:$0xff]
    %v253 = vld [vmem:[#allocation10 + $0x128] sm:$0xff]
    %v254 = vld [vmem:[#allocation10 + $0x130] sm:$0xff]
    %v255 = vld [vmem:[#allocation10 + $0x138] sm:$0xff]
    %v256 = vld [vmem:[#allocation10 + $0x140] sm:$0xff]
    %v257 = vld [vmem:[#allocation10 + $0x148] sm:$0xff]
    %v258 = vld [vmem:[#allocation10 + $0x150] sm:$0xff]
    %v259 = vld [vmem:[#allocation10 + $0x158] sm:$0xff]
    %v260 = vld [vmem:[#allocation10 + $0x160] sm:$0xff]
    %v261 = vld [vmem:[#allocation10 + $0x168] sm:$0xff]
    %v262 = vld [vmem:[#allocation10 + $0x170] sm:$0xff]
    %v263 = vld [vmem:[#allocation10 + $0x178] sm:$0xff]
    %v264 = vld [vmem:[%s5] sm:$0x1]
    %v266 = vperm.slane %v264, 0
    %268 = vmatpush.msra.mxu0 %v231
    %269 = vmatpush.msra.mxu0 %v230
    %270 = vmatpush.msra.mxu0 %v229
    %271 = vmatpush.msra.mxu0 %v228
    %272 = vmatpush.msra.mxu0 %v227
    %273 = vmatpush.msra.mxu0 %v226
    %274 = vmatpush.msra.mxu0 %v225
    %275 = vmatpush.msra.mxu0 %v224
    %276 = vmatpush.msra.mxu0 %v223
    %277 = vmatpush.msra.mxu0 %v222
    %278 = vmatpush.msra.mxu0 %v221
    %279 = vmatpush.msra.mxu0 %v220
    %280 = vmatpush.msra.mxu0 %v219
    %281 = vmatpush.msra.mxu0 %v218
    %282 = vmatpush.msra.mxu0 %v217
    %283 = vmatpush.msra.mxu0 %v216
    %284 = vmatmul.f32.gmra.mxu0 %v213
    %v285 = vpop.f32.mrf.mxu0
    %v286 = vadd.f32 %v266, %v285
    %287 = vdwg.mxu0
    %288 = vmatpush.msra.mxu0 %v247
    %289 = vmatpush.msra.mxu0 %v246
    %290 = vmatpush.msra.mxu0 %v245
    %291 = vmatpush.msra.mxu0 %v244
    %292 = vmatpush.msra.mxu0 %v243
    %293 = vmatpush.msra.mxu0 %v242
    %294 = vmatpush.msra.mxu0 %v241
    %295 = vmatpush.msra.mxu0 %v240
    %296 = vmatpush.msra.mxu0 %v239
    %297 = vmatpush.msra.mxu0 %v238
    %298 = vmatpush.msra.mxu0 %v237
    %299 = vmatpush.msra.mxu0 %v236
    %300 = vmatpush.msra.mxu0 %v235
    %301 = vmatpush.msra.mxu0 %v234
    %302 = vmatpush.msra.mxu0 %v233
    %303 = vmatpush.msra.mxu0 %v232
    %304 = vmatmul.f32.gmra.mxu0 %v214
    %v305 = vpop.f32.mrf.mxu0
    %v306 = vadd.f32 %v286, %v305
    %307 = vdwg.mxu0
    %308 = vmatpush.msra.mxu0 %v263
    %309 = vmatpush.msra.mxu0 %v262
    %310 = vmatpush.msra.mxu0 %v261
    %311 = vmatpush.msra.mxu0 %v260
    %312 = vmatpush.msra.mxu0 %v259
    %313 = vmatpush.msra.mxu0 %v258
    %314 = vmatpush.msra.mxu0 %v257
    %315 = vmatpush.msra.mxu0 %v256
    %316 = vmatpush.msra.mxu0 %v255
    %317 = vmatpush.msra.mxu0 %v254
    %318 = vmatpush.msra.mxu0 %v253
    %319 = vmatpush.msra.mxu0 %v252
    %320 = vmatpush.msra.mxu0 %v251
    %321 = vmatpush.msra.mxu0 %v250
    %322 = vmatpush.msra.mxu0 %v249
    %323 = vmatpush.msra.mxu0 %v248
    %324 = vmatmul.f32.gmra.mxu0 %v215
    %v325 = vpop.f32.mrf.mxu0
    %v326 = vadd.f32 %v306, %v325
    %327 = vdwg.mxu0
    %v328 = vld [vmem:[#allocation2] sm:$0xff]
    %v329 = vmul.f32 %v328, %v326
    %330 = vst [vmem:[#allocation11] sm:$0xff] %v329
    // Predicated region
    $region46: #{tpu_custom_call.1} parent=1 // pred_check
      _
    $region47: #{tpu_custom_call.1} parent=1 // pred_check_branch
      %332 = sbr.rel (0) target = $region49
    $region48: #{tpu_custom_call.1} parent=1 // pred_region
      %334 = vsyncadd [#allocation4], 0
      %s336 = sshll.u32 [#allocation11], 4
      %s337 = int_to_ptr.vmem [resolvable:$true] %s336
      %s338 = sshll.u32 %s6, 4
      %s339 = int_to_ptr.hbm [resolvable:$true] %s338
      %341 = dma.vmem_to_hbm [thread:$0]  %s337, 128, %s339, [#allocation4]
    $region49: #{tpu_custom_call.1} parent=1 // pred_fallthru
      _
    // Predicated region
    $region50: #{tpu_custom_call.1} parent=1 // pred_check
      _
    $region51: #{tpu_custom_call.1} parent=1 // pred_check_branch
      %343 = sbr.rel (0) target = $region53
    $region52: #{tpu_custom_call.1} parent=1 // pred_region
      %345 = dma.done [#allocation4], 128
    $region53: #{tpu_custom_call.1} parent=1 // pred_fallthru
      _
    %346 = vsyncpa [#allocation3], 1
    %347 = vsyncpa [#allocation6], 1
    %348 = vsyncpa [#allocation9], 1
    %349 = vsyncpa [#allocation4], 1

</llo_original>
